<compile_context>
chip_gen: v7x
topology: tpu7x:2x2x1
jax: 0.10.0
libtpu: 0.0.40
codegen_flags: <defaults>
</compile_context>

<pallas_src>
import jax
import jax.numpy as jnp
from jax.experimental import pallas as pl
from jax.experimental.pallas import tpu as pltpu


def _round_up(n, mult):
    return ((n + mult - 1) // mult) * mult


def residual_block_kernel(x_ref, w1_ref, b1_ref, w2_ref, b2_ref, o_ref):
    """Fused: h = tanh(x @ W1t + b1); y = tanh(h @ W2t + b2); out = y + x.

    Weights arrive pre-transposed (in, out) and possibly bf16; biases are f32
    rows (1, m).  Matmuls accumulate in f32 on the MXU; bias/tanh/residual run
    in f32 on the VPU/EUP.
    """
    x = x_ref[...]                 # loaded once; reused for the residual add
    mm_dtype = w1_ref.dtype        # f32 or bf16 matmul operands
    h = jnp.tanh(
        jnp.dot(x.astype(mm_dtype), w1_ref[...],
                preferred_element_type=jnp.float32)
        + b1_ref[...]
    )
    y = jnp.tanh(
        jnp.dot(h.astype(mm_dtype), w2_ref[...],
                preferred_element_type=jnp.float32)
        + b2_ref[...]
    )
    o_ref[...] = (y + x.astype(jnp.float32)).astype(o_ref.dtype)


def prepare_residual_block_params(w1, b1, w2, b2, *, matmul_dtype=None):
    """One-time parameter prep (cache the result; do not re-run per forward call).

    * transpose (out, in) -> (in, out) so the kernel contracts x @ W directly,
    * zero-pad features to a multiple of 128 lanes (exact: padded output
      columns are tanh(0 + 0) + 0 = 0 and get sliced off),
    * optionally cast weights to bf16 for the MXU,
    * biases kept in f32, reshaped to (1, m_pad).
    """
    m = w1.shape[0]
    m_pad = max(_round_up(m, 128), 128)
    p = m_pad - m

    def prep_w(w):
        wt = jnp.asarray(w).T                      # (in, out)
        if p:
            wt = jnp.pad(wt, ((0, p), (0, p)))
        if matmul_dtype is not None:
            wt = wt.astype(matmul_dtype)
        return wt

    def prep_b(b):
        b = jnp.asarray(b, jnp.float32)
        if p:
            b = jnp.pad(b, (0, p))
        return b.reshape(1, m_pad)

    return {
        "w1": prep_w(w1), "b1": prep_b(b1),
        "w2": prep_w(w2), "b2": prep_b(b2),
        "m": m, "m_pad": m_pad,
    }


def residual_block_apply(x, params, *, batch_tile=512):
    """x: (B, m) float.  params: output of prepare_residual_block_params."""
    B, m = x.shape
    assert m == params["m"], "feature width mismatch vs prepared params"
    m_pad = params["m_pad"]
    w1, b1, w2, b2 = params["w1"], params["b1"], params["w2"], params["b2"]

    x_in = jnp.pad(x, ((0, 0), (0, m_pad - m))) if m_pad != m else x

    w_bytes = 2 * m_pad * m_pad * w1.dtype.itemsize + 2 * m_pad * 4
    io_item = max(x.dtype.itemsize, 4)
    cost = pl.CostEstimate(
        flops=4 * B * m_pad * m_pad,                 # two (B,m)x(m,m) matmuls
        transcendentals=2 * B * m_pad,               # two tanh passes
        bytes_accessed=int(2 * B * m_pad * x.dtype.itemsize + w_bytes),
    )

    if B <= batch_tile:
        # Small batch: single invocation, whole operands VMEM-resident, no grid
        # / pipeline machinery.
        needed = w_bytes + 2 * B * m_pad * io_item
        vmem_limit = int(min(100 << 20, max(32 << 20, 2 * needed)))
        out = pl.pallas_call(
            residual_block_kernel,
            out_shape=jax.ShapeDtypeStruct((B, m_pad), x.dtype),
            in_specs=[pl.BlockSpec(memory_space=pltpu.MemorySpace.VMEM)] * 5,
            out_specs=pl.BlockSpec(memory_space=pltpu.MemorySpace.VMEM),
            compiler_params=pltpu.CompilerParams(vmem_limit_bytes=vmem_limit),
            cost_estimate=cost,
        )(x_in, w1, b1, w2, b2)
    else:
        # Large batch: tile rows with a 1-D parallel grid (megacore sharding on
        # v7x).  Weights/biases are whole-array VMEM operands: copied in once,
        # single buffer, no per-step DMA.  Only the x/out tiles are pipelined.
        tb = batch_tile
        needed = w_bytes + 2 * 2 * tb * m_pad * io_item   # double-buffered x/out tiles
        vmem_limit = int(min(100 << 20, max(32 << 20, 2 * needed)))
        out = pl.pallas_call(
            residual_block_kernel,
            out_shape=jax.ShapeDtypeStruct((B, m_pad), x.dtype),
            grid=(pl.cdiv(B, tb),),
            in_specs=[
                pl.BlockSpec((tb, m_pad), lambda i: (i, 0)),         # x tile
                pl.BlockSpec(memory_space=pltpu.MemorySpace.VMEM),   # W1 (resident)
                pl.BlockSpec(memory_space=pltpu.MemorySpace.VMEM),   # b1 (resident)
                pl.BlockSpec(memory_space=pltpu.MemorySpace.VMEM),   # W2 (resident)
                pl.BlockSpec(memory_space=pltpu.MemorySpace.VMEM),   # b2 (resident)
            ],
            out_specs=pl.BlockSpec((tb, m_pad), lambda i: (i, 0)),
            compiler_params=pltpu.CompilerParams(
                dimension_semantics=("parallel",),
                vmem_limit_bytes=vmem_limit,
            ),
            cost_estimate=cost,
        )(x_in, w1, b1, w2, b2)

    if m_pad != m:
        out = out[:, :m]
    return out


def residual_block(x, w1, b1, w2, b2, *, batch_tile=512, matmul_dtype=None):
    """Convenience wrapper: prep (transpose/pad/cast) + apply in one call.

    For production use, call prepare_residual_block_params once and reuse the
    prepared params across forward calls.
    """
    params = prepare_residual_block_params(w1, b1, w2, b2, matmul_dtype=matmul_dtype)
    return residual_block_apply(x, params, batch_tile=batch_tile)


if __name__ == "__main__":
    key = jax.random.PRNGKey(0)
    B, m = 8, 32  # batch=8, hidden=32

    kx, kw1, kb1, kw2, kb2 = jax.random.split(key, 5)
    x = jax.random.normal(kx, (B, m), dtype=jnp.float32)

    # Deterministic params mimicking nn.Linear(m, m): W (out, in), b (out,)
    bound = 1.0 / (m ** 0.5)
    w1 = jax.random.uniform(kw1, (m, m), minval=-bound, maxval=bound, dtype=jnp.float32)
    b1 = jax.random.uniform(kb1, (m,), minval=-bound, maxval=bound, dtype=jnp.float32)
    w2 = jax.random.uniform(kw2, (m, m), minval=-bound, maxval=bound, dtype=jnp.float32)
    b2 = jax.random.uniform(kb2, (m,), minval=-bound, maxval=bound, dtype=jnp.float32)

    # Pure-JAX reference (same math as the PyTorch forward).
    ref = jnp.tanh(jnp.tanh(x @ w1.T + b1) @ w2.T + b2) + x

    # 1) Exact f32 path, small-batch (no grid).
    params_f32 = prepare_residual_block_params(w1, b1, w2, b2)
    out = jax.block_until_ready(residual_block_apply(x, params_f32))
    assert jnp.allclose(out, ref, atol=1e-5, rtol=1e-5), "f32 small-path mismatch"

    # 2) bf16-matmul path (f32 accumulation) -- looser tolerance by design.
    params_bf16 = prepare_residual_block_params(w1, b1, w2, b2, matmul_dtype=jnp.bfloat16)
    out_bf16 = jax.block_until_ready(residual_block_apply(x, params_bf16))
    assert jnp.allclose(out_bf16, ref, atol=1e-1, rtol=1e-1), "bf16 path mismatch"

    # 3) Batch-tiled path: weights VMEM-resident, parallel batch axis, 4 grid steps.
    xb = jax.random.normal(kx, (1024, m), dtype=jnp.float32)
    refb = jnp.tanh(jnp.tanh(xb @ w1.T + b1) @ w2.T + b2) + xb
    outb = jax.block_until_ready(residual_block_apply(xb, params_f32, batch_tile=256))
    assert jnp.allclose(outb, refb, atol=1e-5, rtol=1e-5), "tiled-path mismatch"

    print("KERNEL_OK")
</pallas_src>

<mosaic_0001>
module attributes {stable_mosaic.version = 11 : i64} {
  func.func @residual_block_kernel(%arg0: memref<8x128xf32, #tpu.memory_space<vmem>>, %arg1: memref<128x128xf32, #tpu.memory_space<vmem>>, %arg2: memref<1x128xf32, #tpu.memory_space<vmem>>, %arg3: memref<128x128xf32, #tpu.memory_space<vmem>>, %arg4: memref<1x128xf32, #tpu.memory_space<vmem>>, %arg5: memref<8x128xf32, #tpu.memory_space<vmem>>) attributes {dimension_semantics = [], scalar_prefetch = 0 : i64, scratch_operands = 0 : i64, tpu.core_type = #tpu.core_type<tc>} {
    %c0 = arith.constant 0 : index
    %c0_0 = arith.constant 0 : index
    %0 = vector.load %arg0[%c0, %c0_0] : memref<8x128xf32, #tpu.memory_space<vmem>>, vector<8x128xf32>
    %c0_1 = arith.constant 0 : index
    %c0_2 = arith.constant 0 : index
    %1 = vector.load %arg1[%c0_1, %c0_2] : memref<128x128xf32, #tpu.memory_space<vmem>>, vector<128x128xf32>
    %cst = arith.constant dense<0.000000e+00> : vector<8x128xf32>
    %2 = tpu.matmul %0, %1, %cst {dimension_numbers = #tpu.dot_dimension_numbers<[1], [0], [0], [1], [0, 0, 1, 1], [], []>} : vector<8x128xf32>, vector<128x128xf32>, vector<8x128xf32> -> vector<8x128xf32>
    %c0_3 = arith.constant 0 : index
    %c0_4 = arith.constant 0 : index
    %3 = vector.load %arg2[%c0_3, %c0_4] : memref<1x128xf32, #tpu.memory_space<vmem>>, vector<1x128xf32>
    %4 = vector.broadcast %3 : vector<1x128xf32> to vector<8x128xf32>
    %5 = arith.addf %2, %4 : vector<8x128xf32>
    %6 = math.tanh %5 : vector<8x128xf32>
    %c0_5 = arith.constant 0 : index
    %c0_6 = arith.constant 0 : index
    %7 = vector.load %arg3[%c0_5, %c0_6] : memref<128x128xf32, #tpu.memory_space<vmem>>, vector<128x128xf32>
    %cst_7 = arith.constant dense<0.000000e+00> : vector<8x128xf32>
    %8 = tpu.matmul %6, %7, %cst_7 {dimension_numbers = #tpu.dot_dimension_numbers<[1], [0], [0], [1], [0, 0, 1, 1], [], []>} : vector<8x128xf32>, vector<128x128xf32>, vector<8x128xf32> -> vector<8x128xf32>
    %c0_8 = arith.constant 0 : index
    %c0_9 = arith.constant 0 : index
    %9 = vector.load %arg4[%c0_8, %c0_9] : memref<1x128xf32, #tpu.memory_space<vmem>>, vector<1x128xf32>
    %10 = vector.broadcast %9 : vector<1x128xf32> to vector<8x128xf32>
    %11 = arith.addf %8, %10 : vector<8x128xf32>
    %12 = math.tanh %11 : vector<8x128xf32>
    %13 = arith.addf %12, %0 : vector<8x128xf32>
    %c0_10 = arith.constant 0 : index
    %c0_11 = arith.constant 0 : index
    %14 = vector.load %arg5[%c0_10, %c0_11] : memref<8x128xf32, #tpu.memory_space<vmem>>, vector<8x128xf32>
    tpu.vector_store %arg5[%c0_10, %c0_11], %13 {strides = array<i32>} : memref<8x128xf32, #tpu.memory_space<vmem>>, vector<8x128xf32>,
    return
  }
}

</mosaic_0001>

<llo_original>
// kernel: tpu_custom_call.1
$region0: #{tpu_custom_call.1}
  #allocation0 [shape = 'u32[]', space=smem, size = 0x4, offset = 0x4, fixed_abs, tag = 'smem constant byte address 0x4 - core index']
  #allocation1 [shape = 'u32[144,128]{1,0:T(1,128)}', space=vmem, size = 0x12000, scoped, tag = 'internal scratch']
  %s0 = inlined_call_operand.hbm [shape: f32[8,128], index: 0, kind: input, shape index: {}]
  %s1 = inlined_call_operand.hbm [shape: f32[128,128], index: 1, kind: input, shape index: {}]
  %s2 = inlined_call_operand.vmem [shape: f32[1,128], index: 2, kind: input, shape index: {}]
  %s3 = inlined_call_operand.hbm [shape: f32[128,128], index: 3, kind: input, shape index: {}]
  %s4 = inlined_call_operand.vmem [shape: f32[1,128], index: 4, kind: input, shape index: {}]
  %s5 = inlined_call_operand.hbm [shape: f32[8,128], index: 5, kind: output, shape index: {}]
  %s6 = sld [smem:[#allocation0]]
  $region42: #{tpu_custom_call.1} parent=0
    _
  %s8 = ssub.s32 1, %s6
  %s9 = scalar_select 0, %s8, %s6
  $region1: #{tpu_custom_call.1} parent=0
    #allocation2 [shape = 'u8[4096]{0}', space=vmem, size = 0x1000, scoped, tag = 'input window, operand 0, single buffered']
    #allocation3 [shape = 's32[1]{0}', space=sflag, size = 0x4, scoped, tag = 'scoped memory for tpu_custom_call.1']
    #allocation4 [shape = 's32[1]{0}', space=sflag, size = 0x4, scoped, tag = 'scoped memory for tpu_custom_call.1']
    #allocation5 [shape = 'u8[65536]{0}', space=vmem, size = 0x10000, scoped, tag = 'input window, operand 1, single buffered']
    #allocation6 [shape = 's32[1]{0}', space=sflag, size = 0x4, scoped, tag = 'scoped memory for tpu_custom_call.1']
    #allocation7 [shape = 'u8[65536]{0}', space=vmem, size = 0x10000, scoped, tag = 'input window, operand 3, single buffered']
    #allocation8 [shape = 'u8[4096]{0}', space=vmem, size = 0x1000, scoped, tag = 'output window, operand 0, single buffered']
    %10 = vsyncpa [#allocation3], 0
    %11 = vsyncpa [#allocation6], 0
    %12 = vsyncpa [#allocation4], 0
    // Predicated region
    $region2: #{tpu_custom_call.1} parent=1 // pred_check
      _
    $region3: #{tpu_custom_call.1} parent=1 // pred_check_branch
      %14 = sbr.rel (0) target = $region5
    $region4: #{tpu_custom_call.1} parent=1 // pred_region
      %s16 = ssub.s32 128, 128
      %17 = vsyncadd [#allocation3], %s16
      %s19 = sshll.u32 [#allocation2], 4
      %s20 = int_to_ptr.vmem [resolvable:$true] %s19
      %22 = dma.hbm_to_vmem [thread:$0]  %s0, 128, %s20, [#allocation3]
    $region5: #{tpu_custom_call.1} parent=1 // pred_fallthru
      _
    // Predicated region
    $region6: #{tpu_custom_call.1} parent=1 // pred_check
      _
    $region7: #{tpu_custom_call.1} parent=1 // pred_check_branch
      %24 = sbr.rel (0) target = $region9
    $region8: #{tpu_custom_call.1} parent=1 // pred_region
      %s26 = ssub.s32 2048, 2048
      %27 = vsyncadd [#allocation6], %s26
      %s28 = sshll.u32 [#allocation5], 4
      %s29 = int_to_ptr.vmem [resolvable:$true] %s28
      %34 = dma.hbm_to_vmem [thread:$0]  %s1, 2048, %s29, [#allocation6], 128, 128, 8
    $region9: #{tpu_custom_call.1} parent=1 // pred_fallthru
      _
    // Predicated region
    $region10: #{tpu_custom_call.1} parent=1 // pred_check
      _
    $region11: #{tpu_custom_call.1} parent=1 // pred_check_branch
      %36 = sbr.rel (0) target = $region13
    $region12: #{tpu_custom_call.1} parent=1 // pred_region
      _
    $region13: #{tpu_custom_call.1} parent=1 // pred_fallthru
      _
    // Predicated region
    $region14: #{tpu_custom_call.1} parent=1 // pred_check
      _
    $region15: #{tpu_custom_call.1} parent=1 // pred_check_branch
      %38 = sbr.rel (0) target = $region17
    $region16: #{tpu_custom_call.1} parent=1 // pred_region
      %s40 = ssub.s32 2048, 2048
      %41 = vsyncadd [#allocation6], %s40
      %s42 = sshll.u32 [#allocation7], 4
      %s43 = int_to_ptr.vmem [resolvable:$true] %s42
      %48 = dma.hbm_to_vmem [thread:$0]  %s3, 2048, %s43, [#allocation6], 128, 128, 8
    $region17: #{tpu_custom_call.1} parent=1 // pred_fallthru
      _
    // Predicated region
    $region18: #{tpu_custom_call.1} parent=1 // pred_check
      _
    $region19: #{tpu_custom_call.1} parent=1 // pred_check_branch
      %50 = sbr.rel (0) target = $region21
    $region20: #{tpu_custom_call.1} parent=1 // pred_region
      _
    $region21: #{tpu_custom_call.1} parent=1 // pred_fallthru
      _
    // Predicated region
    $region22: #{tpu_custom_call.1} parent=1 // pred_check
      _
    $region23: #{tpu_custom_call.1} parent=1 // pred_check_branch
      %52 = sbr.rel (0) target = $region25
    $region24: #{tpu_custom_call.1} parent=1 // pred_region
      %53 = dma.done [#allocation3], 128
    $region25: #{tpu_custom_call.1} parent=1 // pred_fallthru
      _
    // Predicated region
    $region26: #{tpu_custom_call.1} parent=1 // pred_check
      _
    $region27: #{tpu_custom_call.1} parent=1 // pred_check_branch
      %55 = sbr.rel (0) target = $region29
    $region28: #{tpu_custom_call.1} parent=1 // pred_region
      %56 = dma.done [#allocation6], 2048
    $region29: #{tpu_custom_call.1} parent=1 // pred_fallthru
      _
    // Predicated region
    $region30: #{tpu_custom_call.1} parent=1 // pred_check
      _
    $region31: #{tpu_custom_call.1} parent=1 // pred_check_branch
      %58 = sbr.rel (0) target = $region33
    $region32: #{tpu_custom_call.1} parent=1 // pred_region
      %59 = dma.done [#allocation6], 2048
    $region33: #{tpu_custom_call.1} parent=1 // pred_fallthru
      _
    %v60 = vld [vmem:[#allocation2] sm:$0xff]
    %v61 = vld [vmem:[#allocation5] sm:$0xff]
    %v62 = vld [vmem:[#allocation5 + $0x8] sm:$0xff]
    %v63 = vld [vmem:[#allocation5 + $0x10] sm:$0xff]
    %v64 = vld [vmem:[#allocation5 + $0x18] sm:$0xff]
    %v65 = vld [vmem:[#allocation5 + $0x20] sm:$0xff]
    %v66 = vld [vmem:[#allocation5 + $0x28] sm:$0xff]
    %v67 = vld [vmem:[#allocation5 + $0x30] sm:$0xff]
    %v68 = vld [vmem:[#allocation5 + $0x38] sm:$0xff]
    %v69 = vld [vmem:[#allocation5 + $0x40] sm:$0xff]
    %v70 = vld [vmem:[#allocation5 + $0x48] sm:$0xff]
    %v71 = vld [vmem:[#allocation5 + $0x50] sm:$0xff]
    %v72 = vld [vmem:[#allocation5 + $0x58] sm:$0xff]
    %v73 = vld [vmem:[#allocation5 + $0x60] sm:$0xff]
    %v74 = vld [vmem:[#allocation5 + $0x68] sm:$0xff]
    %v75 = vld [vmem:[#allocation5 + $0x70] sm:$0xff]
    %v76 = vld [vmem:[#allocation5 + $0x78] sm:$0xff]
    %v77 = vld [vmem:[%s2] sm:$0x1]
    %v79 = vlaneseq
    %v80 = vshrl.u32 %v79, 7
    %v81 = vsub.s32 0, %v80
    %v82 = vrot.slane %v77, %v81
    %84 = vmatprep.subr.mxu0 0.0
    %85 = vmatpush1.msra.mxu0 %v61
    %86 = vmatprep.subr.mxu0 0.0
    %87 = vmatpush1.msra.mxu0 %v62
    %88 = vmatprep.subr.mxu0 0.0
    %89 = vmatpush1.msra.mxu0 %v63
    %90 = vmatprep.subr.mxu0 0.0
    %91 = vmatpush1.msra.mxu0 %v64
    %92 = vmatprep.subr.mxu0 0.0
    %93 = vmatpush1.msra.mxu0 %v65
    %94 = vmatprep.subr.mxu0 0.0
    %95 = vmatpush1.msra.mxu0 %v66
    %96 = vmatprep.subr.mxu0 0.0
    %97 = vmatpush1.msra.mxu0 %v67
    %98 = vmatprep.subr.mxu0 0.0
    %99 = vmatpush1.msra.mxu0 %v68
    %100 = vmatprep.subr.mxu0 0.0
    %101 = vmatpush1.msra.mxu0 %v69
    %102 = vmatprep.subr.mxu0 0.0
    %103 = vmatpush1.msra.mxu0 %v70
    %104 = vmatprep.subr.mxu0 0.0
    %105 = vmatpush1.msra.mxu0 %v71
    %106 = vmatprep.subr.mxu0 0.0
    %107 = vmatpush1.msra.mxu0 %v72
    %108 = vmatprep.subr.mxu0 0.0
    %109 = vmatpush1.msra.mxu0 %v73
    %110 = vmatprep.subr.mxu0 0.0
    %111 = vmatpush1.msra.mxu0 %v74
    %112 = vmatprep.subr.mxu0 0.0
    %113 = vmatpush1.msra.mxu0 %v75
    %114 = vmatprep.subr.mxu0 0.0
    %115 = vmatpush1.msra.mxu0 %v76
    %116 = vmatprep.subr.mxu0 0.0
    %117 = vmatpush1.msra.mxu0 0.0
    %118 = vmatprep.subr.mxu0 0.0
    %119 = vmatpush1.msra.mxu0 0.0
    %120 = vmatprep.subr.mxu0 0.0
    %121 = vmatpush1.msra.mxu0 0.0
    %122 = vmatprep.subr.mxu0 0.0
    %123 = vmatpush1.msra.mxu0 0.0
    %124 = vmatprep.subr.mxu0 0.0
    %125 = vmatpush1.msra.mxu0 0.0
    %126 = vmatprep.subr.mxu0 0.0
    %127 = vmatpush1.msra.mxu0 0.0
    %128 = vmatprep.subr.mxu0 0.0
    %129 = vmatpush1.msra.mxu0 0.0
    %130 = vmatprep.subr.mxu0 0.0
    %131 = vmatpush1.msra.mxu0 0.0
    %132 = vmatprep.subr.mxu0 0.0
    %133 = vmatpush1.msra.mxu0 0.0
    %134 = vmatprep.subr.mxu0 0.0
    %135 = vmatpush1.msra.mxu0 0.0
    %136 = vmatprep.subr.mxu0 0.0
    %137 = vmatpush1.msra.mxu0 0.0
    %138 = vmatprep.subr.mxu0 0.0
    %139 = vmatpush1.msra.mxu0 0.0
    %140 = vmatprep.subr.mxu0 0.0
    %141 = vmatpush1.msra.mxu0 0.0
    %142 = vmatprep.subr.mxu0 0.0
    %143 = vmatpush1.msra.mxu0 0.0
    %144 = vmatprep.subr.mxu0 0.0
    %145 = vmatpush1.msra.mxu0 0.0
    %146 = vmatprep.subr.mxu0 0.0
    %147 = vmatpush1.msra.mxu0 0.0
    %148 = vmatprep.mubr.f32.mxu0 0.0
    %149 = vmatmul.mubr.f32.gmra.mrb[0].mxu0 %v60
    %v150 = vpop.f32.mrb[0].mxu0
    %v151 = vadd.f32 %v82, %v150
    %v152 = vpop.f32.mrb[0].mxu0
    %153 = vdwg.mxu0
    %v154 = vtanh.pop %v151
    %v155 = vld [vmem:[#allocation7] sm:$0xff]
    %v156 = vld [vmem:[#allocation7 + $0x8] sm:$0xff]
    %v157 = vld [vmem:[#allocation7 + $0x10] sm:$0xff]
    %v158 = vld [vmem:[#allocation7 + $0x18] sm:$0xff]
    %v159 = vld [vmem:[#allocation7 + $0x20] sm:$0xff]
    %v160 = vld [vmem:[#allocation7 + $0x28] sm:$0xff]
    %v161 = vld [vmem:[#allocation7 + $0x30] sm:$0xff]
    %v162 = vld [vmem:[#allocation7 + $0x38] sm:$0xff]
    %v163 = vld [vmem:[#allocation7 + $0x40] sm:$0xff]
    %v164 = vld [vmem:[#allocation7 + $0x48] sm:$0xff]
    %v165 = vld [vmem:[#allocation7 + $0x50] sm:$0xff]
    %v166 = vld [vmem:[#allocation7 + $0x58] sm:$0xff]
    %v167 = vld [vmem:[#allocation7 + $0x60] sm:$0xff]
    %v168 = vld [vmem:[#allocation7 + $0x68] sm:$0xff]
    %v169 = vld [vmem:[#allocation7 + $0x70] sm:$0xff]
    %v170 = vld [vmem:[#allocation7 + $0x78] sm:$0xff]
    %v171 = vld [vmem:[%s4] sm:$0x1]
    %v173 = vlaneseq
    %v174 = vshrl.u32 %v173, 7
    %v175 = vsub.s32 0, %v174
    %v176 = vrot.slane %v171, %v175
    %178 = vmatprep.subr.mxu0 0.0
    %179 = vmatpush1.msra.mxu0 %v155
    %180 = vmatprep.subr.mxu0 0.0
    %181 = vmatpush1.msra.mxu0 %v156
    %182 = vmatprep.subr.mxu0 0.0
    %183 = vmatpush1.msra.mxu0 %v157
    %184 = vmatprep.subr.mxu0 0.0
    %185 = vmatpush1.msra.mxu0 %v158
    %186 = vmatprep.subr.mxu0 0.0
    %187 = vmatpush1.msra.mxu0 %v159
    %188 = vmatprep.subr.mxu0 0.0
    %189 = vmatpush1.msra.mxu0 %v160
    %190 = vmatprep.subr.mxu0 0.0
    %191 = vmatpush1.msra.mxu0 %v161
    %192 = vmatprep.subr.mxu0 0.0
    %193 = vmatpush1.msra.mxu0 %v162
    %194 = vmatprep.subr.mxu0 0.0
    %195 = vmatpush1.msra.mxu0 %v163
    %196 = vmatprep.subr.mxu0 0.0
    %197 = vmatpush1.msra.mxu0 %v164
    %198 = vmatprep.subr.mxu0 0.0
    %199 = vmatpush1.msra.mxu0 %v165
    %200 = vmatprep.subr.mxu0 0.0
    %201 = vmatpush1.msra.mxu0 %v166
    %202 = vmatprep.subr.mxu0 0.0
    %203 = vmatpush1.msra.mxu0 %v167
    %204 = vmatprep.subr.mxu0 0.0
    %205 = vmatpush1.msra.mxu0 %v168
    %206 = vmatprep.subr.mxu0 0.0
    %207 = vmatpush1.msra.mxu0 %v169
    %208 = vmatprep.subr.mxu0 0.0
    %209 = vmatpush1.msra.mxu0 %v170
    %210 = vmatprep.subr.mxu0 0.0
    %211 = vmatpush1.msra.mxu0 0.0
    %212 = vmatprep.subr.mxu0 0.0
    %213 = vmatpush1.msra.mxu0 0.0
    %214 = vmatprep.subr.mxu0 0.0
    %215 = vmatpush1.msra.mxu0 0.0
    %216 = vmatprep.subr.mxu0 0.0
    %217 = vmatpush1.msra.mxu0 0.0
    %218 = vmatprep.subr.mxu0 0.0
    %219 = vmatpush1.msra.mxu0 0.0
    %220 = vmatprep.subr.mxu0 0.0
    %221 = vmatpush1.msra.mxu0 0.0
    %222 = vmatprep.subr.mxu0 0.0
    %223 = vmatpush1.msra.mxu0 0.0
    %224 = vmatprep.subr.mxu0 0.0
    %225 = vmatpush1.msra.mxu0 0.0
    %226 = vmatprep.subr.mxu0 0.0
    %227 = vmatpush1.msra.mxu0 0.0
    %228 = vmatprep.subr.mxu0 0.0
    %229 = vmatpush1.msra.mxu0 0.0
    %230 = vmatprep.subr.mxu0 0.0
    %231 = vmatpush1.msra.mxu0 0.0
    %232 = vmatprep.subr.mxu0 0.0
    %233 = vmatpush1.msra.mxu0 0.0
    %234 = vmatprep.subr.mxu0 0.0
    %235 = vmatpush1.msra.mxu0 0.0
    %236 = vmatprep.subr.mxu0 0.0
    %237 = vmatpush1.msra.mxu0 0.0
    %238 = vmatprep.subr.mxu0 0.0
    %239 = vmatpush1.msra.mxu0 0.0
    %240 = vmatprep.subr.mxu0 0.0
    %241 = vmatpush1.msra.mxu0 0.0
    %242 = vmatprep.mubr.f32.mxu0 0.0
    %243 = vmatmul.mubr.f32.gmra.mrb[0].mxu0 %v154
    %v244 = vpop.f32.mrb[0].mxu0
    %v245 = vadd.f32 %v176, %v244
    %v246 = vpop.f32.mrb[0].mxu0
    %247 = vdwg.mxu0
    %v248 = vtanh.pop %v245
    %v249 = vadd.f32 %v248, %v60
    %250 = vst [vmem:[#allocation8] sm:$0xff] %v249
    // Predicated region
    $region34: #{tpu_custom_call.1} parent=1 // pred_check
      _
    $region35: #{tpu_custom_call.1} parent=1 // pred_check_branch
      %252 = sbr.rel (0) target = $region37
    $region36: #{tpu_custom_call.1} parent=1 // pred_region
      %s254 = ssub.s32 128, 128
      %255 = vsyncadd [#allocation4], %s254
      %s257 = sshll.u32 [#allocation8], 4
      %s258 = int_to_ptr.vmem [resolvable:$true] %s257
      %260 = dma.vmem_to_hbm [thread:$0]  %s258, 128, %s5, [#allocation4]
    $region37: #{tpu_custom_call.1} parent=1 // pred_fallthru
      _
    // Predicated region
    $region38: #{tpu_custom_call.1} parent=1 // pred_check
      _
    $region39: #{tpu_custom_call.1} parent=1 // pred_check_branch
      %262 = sbr.rel (0) target = $region41
    $region40: #{tpu_custom_call.1} parent=1 // pred_region
      %263 = dma.done [#allocation4], 128
    $region41: #{tpu_custom_call.1} parent=1 // pred_fallthru
      _
    %264 = vsyncpa [#allocation3], 1
    %265 = vsyncpa [#allocation6], 1
    %266 = vsyncpa [#allocation4], 1

</llo_original>
